<compile_context>
chip_gen: v7x
topology: tpu7x:2x2x1
jax: 0.10.0
libtpu: 0.0.40
codegen_flags: <defaults>
</compile_context>

<pallas_src>
import functools

import jax
import jax.numpy as jnp
import numpy as np
from jax.experimental import pallas as pl
from jax.experimental.pallas import tpu as pltpu

N_GROUP_NORM = 2
_EPS = 1e-5


def _double_conv_kernel(mask_ref, x_ref, w1_ref, g1_ref, b1_ref,
                        w2_ref, g2_ref, b2_ref, out_ref, *, n_groups, H, W):
    # mask_ref : (1, PS)  f32   1.0 on the W valid columns of each (W+2)-wide pseudo row
    # x_ref    : (1, Cin, PADLEN) bf16  flattened zero-padded input (one batch element)
    # w*_ref   : (Cout_layer, 9*Cin_layer) bf16   tap-major im2col weights
    # g*/b*    : (C, 1) f32     GroupNorm affine params (channels on sublanes)
    # out_ref  : (1, Cout, PS)  f32   pseudo-layout output (junk cols dropped by wrapper)
    Wp = W + 2
    PS = H * Wp
    Cmid = w1_ref.shape[0]

    maskf = mask_ref[...]                                       # (1, PS)

    def conv3x3(xflat, w):
        # xflat: (C, PS + 2*Wp + 2) bf16.  Build the (9*C, PS) im2col patch from
        # 9 shifted lane slices, then ONE K=9*C MXU matmul.
        taps = []
        for dh in range(3):
            for dw in range(3):
                off = dh * Wp + dw
                taps.append(xflat[:, off:off + PS])             # (C, PS) lane slice
        patch = jnp.concatenate(taps, axis=0)                   # (9*C, PS)
        return jnp.dot(w, patch, preferred_element_type=jnp.float32)   # (Cout, PS) f32

    def group_norm_relu(y, gamma, beta):
        # y: (C, PS) f32, channels on sublanes.  Single reduction pass per group
        # (sum + sum-of-squares), then one fused scale/shift + ReLU.
        C = y.shape[0]
        cpg = C // n_groups
        cnt = float(cpg * H * W)
        ym = y * maskf                                          # drop junk cols from stats
        scale_parts, shift_parts = [], []
        for g in range(n_groups):
            yg = ym[g * cpg:(g + 1) * cpg, :]
            s = jnp.sum(yg)
            ss = jnp.sum(yg * yg)
            mean = s / cnt
            var = ss / cnt - mean * mean
            rstd = jax.lax.rsqrt(var + _EPS)
            sc = gamma[g * cpg:(g + 1) * cpg, :] * rstd          # (cpg, 1)
            scale_parts.append(sc)
            shift_parts.append(beta[g * cpg:(g + 1) * cpg, :] - mean * sc)
        scale = jnp.concatenate(scale_parts, axis=0)             # (C, 1)
        shift = jnp.concatenate(shift_parts, axis=0)             # (C, 1)
        return jnp.maximum(y * scale + shift, 0.0)

    x = x_ref[0]                                                 # (Cin, PADLEN) bf16

    # --- conv1 + GroupNorm + ReLU ---
    h1 = group_norm_relu(conv3x3(x, w1_ref[...]), g1_ref[...], b1_ref[...])   # (Cmid, PS)

    # Re-pad the intermediate in flattened form: zero the junk columns, then a
    # (Wp+1)-lane zero halo on each side reproduces exactly the zero-padded
    # (H+2, W+2) image of h1.  Pure lane shifts — no scratch, no (8,128)-crossing
    # scatter, no full-slab zeroing.
    h1m = (h1 * maskf).astype(jnp.bfloat16)                      # (Cmid, PS)
    zpad = jnp.zeros((Cmid, Wp + 1), jnp.bfloat16)
    h1p = jnp.concatenate([zpad, h1m, zpad], axis=1)             # (Cmid, PS + 2*Wp + 2)

    # --- conv2 + GroupNorm + ReLU ---
    h2 = group_norm_relu(conv3x3(h1p, w2_ref[...]), g2_ref[...], b2_ref[...])  # (Cout, PS)

    out_ref[0] = h2.astype(out_ref.dtype)


def double_conv_pallas(x_nchw, w1_oihw, g1, b1, w2_oihw, g2, b2, n_groups=N_GROUP_NORM):
    N, Cin, H, W = x_nchw.shape
    Cmid = w1_oihw.shape[0]
    Cout = w2_oihw.shape[0]
    Hp, Wp = H + 2, W + 2
    PS = H * Wp                      # pseudo-output length (junk in last 2 cols of each row)
    PADLEN = PS + 2 * Wp + 2         # = Hp*Wp + 2: slack so every tap slice is in range

    # NCHW, zero-pad spatial, flatten (Hp, Wp) row-major, + 2 zero lanes of slack; bf16.
    xpad = jnp.pad(x_nchw.astype(jnp.float32), ((0, 0), (0, 0), (1, 1), (1, 1)))
    xflat = xpad.reshape(N, Cin, Hp * Wp)
    xflat = jnp.pad(xflat, ((0, 0), (0, 0), (0, PADLEN - Hp * Wp))).astype(jnp.bfloat16)

    # OIHW -> (O, Kh, Kw, I) -> (O, 9*I): row k = (dh*3 + dw)*Cin + ci matches the
    # tap-major patch built in the kernel.
    w1r = jnp.transpose(w1_oihw, (0, 2, 3, 1)).reshape(Cmid, 9 * Cin).astype(jnp.bfloat16)
    w2r = jnp.transpose(w2_oihw, (0, 2, 3, 1)).reshape(Cout, 9 * Cmid).astype(jnp.bfloat16)

    g1r = g1.reshape(Cmid, 1).astype(jnp.float32)
    b1r = b1.reshape(Cmid, 1).astype(jnp.float32)
    g2r = g2.reshape(Cout, 1).astype(jnp.float32)
    b2r = b2.reshape(Cout, 1).astype(jnp.float32)

    # validity mask over the pseudo output: column j of a Wp-wide row is real iff j < W
    mask = jnp.asarray((np.arange(PS) % Wp < W).astype(np.float32).reshape(1, PS))

    kernel = functools.partial(_double_conv_kernel, n_groups=n_groups, H=H, W=W)

    # NOTE: at real UNet sizes, tile spatially (grid over H with a 1-row halo) and set
    # vmem_limit_bytes explicitly so tiles fit v7x's 64 MiB VMEM; toy 16x16 fits easily.
    out_flat = pl.pallas_call(
        kernel,
        out_shape=jax.ShapeDtypeStruct((N, Cout, PS), jnp.float32),
        grid=(N,),
        in_specs=[
            pl.BlockSpec((1, PS), lambda n: (0, 0)),              # mask
            pl.BlockSpec((1, Cin, PADLEN), lambda n: (n, 0, 0)),  # x (one batch element)
            pl.BlockSpec((Cmid, 9 * Cin), lambda n: (0, 0)),      # w1
            pl.BlockSpec((Cmid, 1), lambda n: (0, 0)),            # gamma1
            pl.BlockSpec((Cmid, 1), lambda n: (0, 0)),            # beta1
            pl.BlockSpec((Cout, 9 * Cmid), lambda n: (0, 0)),     # w2
            pl.BlockSpec((Cout, 1), lambda n: (0, 0)),            # gamma2
            pl.BlockSpec((Cout, 1), lambda n: (0, 0)),            # beta2
        ],
        out_specs=pl.BlockSpec((1, Cout, PS), lambda n: (n, 0, 0)),
        compiler_params=pltpu.CompilerParams(
            dimension_semantics=("parallel",)),                   # batch elems independent
    )(mask, xflat, w1r, g1r, b1r, w2r, g2r, b2r)

    # Drop the 2 junk columns per pseudo row; result is already NCHW.
    return out_flat.reshape(N, Cout, H, Wp)[:, :, :, :W]


# ----------------------- pure-JAX reference (for checking) -----------------------
def _group_norm_ref(x_nchw, gamma, beta, n_groups, eps=_EPS):
    N, C, H, W = x_nchw.shape
    xg = x_nchw.reshape(N, n_groups, C // n_groups, H, W)
    mean = jnp.mean(xg, axis=(2, 3, 4), keepdims=True)
    var = jnp.mean(jnp.square(xg - mean), axis=(2, 3, 4), keepdims=True)
    xn = ((xg - mean) * jax.lax.rsqrt(var + eps)).reshape(N, C, H, W)
    return xn * gamma.reshape(1, C, 1, 1) + beta.reshape(1, C, 1, 1)


def double_conv_ref(x, w1, g1, b1, w2, g2, b2, n_groups=N_GROUP_NORM):
    dn = ('NCHW', 'OIHW', 'NCHW')
    h = jax.lax.conv_general_dilated(x, w1, (1, 1), 'SAME', dimension_numbers=dn)
    h = jnp.maximum(_group_norm_ref(h, g1, b1, n_groups), 0.0)
    h = jax.lax.conv_general_dilated(h, w2, (1, 1), 'SAME', dimension_numbers=dn)
    h = jnp.maximum(_group_norm_ref(h, g2, b2, n_groups), 0.0)
    return h


if __name__ == "__main__":
    # batch=2, in_channels=4, out_channels=8 (mid_channels defaults to out_channels), 16x16.
    N, Cin, Cmid, Cout, H, W = 2, 4, 8, 8, 16, 16

    key = jax.random.PRNGKey(0)
    kx, kw1, kw2, kg1, kb1, kg2, kb2 = jax.random.split(key, 7)

    x = jax.random.normal(kx, (N, Cin, H, W), dtype=jnp.float32)

    # conv weights (OIHW, bias=False); GN affine params.
    w1 = jax.random.normal(kw1, (Cmid, Cin, 3, 3), dtype=jnp.float32) * (1.0 / np.sqrt(Cin * 9))
    w2 = jax.random.normal(kw2, (Cout, Cmid, 3, 3), dtype=jnp.float32) * (1.0 / np.sqrt(Cmid * 9))
    g1 = 1.0 + 0.1 * jax.random.normal(kg1, (Cmid,), dtype=jnp.float32)
    b1 = 0.1 * jax.random.normal(kb1, (Cmid,), dtype=jnp.float32)
    g2 = 1.0 + 0.1 * jax.random.normal(kg2, (Cout,), dtype=jnp.float32)
    b2 = 0.1 * jax.random.normal(kb2, (Cout,), dtype=jnp.float32)

    out = jax.block_until_ready(double_conv_pallas(x, w1, g1, b1, w2, g2, b2))
    ref = jax.block_until_ready(double_conv_ref(x, w1, g1, b1, w2, g2, b2))

    assert out.shape == (N, Cout, H, W)
    # bf16 matmul operands -> looser tolerance than a pure-f32 comparison.
    np.testing.assert_allclose(np.asarray(out), np.asarray(ref), rtol=5e-2, atol=5e-2)

    print("KERNEL_OK")
</pallas_src>

<mosaic_0001>
module attributes {stable_mosaic.version = 11 : i64} {
  func.func @_double_conv_kernel(%arg0: i32, %arg1: memref<1x288xf32, #tpu.memory_space<vmem>>, %arg2: memref<1x4x326xbf16, #tpu.memory_space<vmem>>, %arg3: memref<8x36xbf16, #tpu.memory_space<vmem>>, %arg4: memref<8x1xf32, #tpu.memory_space<vmem>>, %arg5: memref<8x1xf32, #tpu.memory_space<vmem>>, %arg6: memref<8x72xbf16, #tpu.memory_space<vmem>>, %arg7: memref<8x1xf32, #tpu.memory_space<vmem>>, %arg8: memref<8x1xf32, #tpu.memory_space<vmem>>, %arg9: memref<1x8x288xf32, #tpu.memory_space<vmem>>) attributes {dimension_semantics = [#tpu.dimension_semantics<parallel>], iteration_bounds = array<i64: 2>, scalar_prefetch = 0 : i64, scratch_operands = 0 : i64, tpu.core_type = #tpu.core_type<tc>, window_params = [{pipeline_mode = #tpu.pipeline_mode<synchronous>, transform_indices = @transform_0, window_bounds = array<i64: 1, 288>}, {transform_indices = @transform_1, window_bounds = array<i64: 1, 4, 326>}, {pipeline_mode = #tpu.pipeline_mode<synchronous>, transform_indices = @transform_2, window_bounds = array<i64: 8, 36>}, {pipeline_mode = #tpu.pipeline_mode<synchronous>, transform_indices = @transform_3, window_bounds = array<i64: 8, 1>}, {pipeline_mode = #tpu.pipeline_mode<synchronous>, transform_indices = @transform_4, window_bounds = array<i64: 8, 1>}, {pipeline_mode = #tpu.pipeline_mode<synchronous>, transform_indices = @transform_5, window_bounds = array<i64: 8, 72>}, {pipeline_mode = #tpu.pipeline_mode<synchronous>, transform_indices = @transform_6, window_bounds = array<i64: 8, 1>}, {pipeline_mode = #tpu.pipeline_mode<synchronous>, transform_indices = @transform_7, window_bounds = array<i64: 8, 1>}, {transform_indices = @transform_8, window_bounds = array<i64: 1, 8, 288>}]} {
    %c0 = arith.constant 0 : index
    %c0_0 = arith.constant 0 : index
    %0 = vector.load %arg1[%c0, %c0_0] : memref<1x288xf32, #tpu.memory_space<vmem>>, vector<1x288xf32>
    %c0_1 = arith.constant 0 : index
    %c0_2 = arith.constant 0 : index
    %c0_3 = arith.constant 0 : index
    %1 = vector.load %arg2[%c0_1, %c0_2, %c0_3] : memref<1x4x326xbf16, #tpu.memory_space<vmem>>, vector<1x4x326xbf16>
    %2 = vector.shape_cast %1 : vector<1x4x326xbf16> to vector<4x326xbf16>
    %c0_4 = arith.constant 0 : index
    %c0_5 = arith.constant 0 : index
    %3 = vector.load %arg3[%c0_4, %c0_5] : memref<8x36xbf16, #tpu.memory_space<vmem>>, vector<8x36xbf16>
    %4 = vector.extract_strided_slice %2 {offsets = [0, 0], sizes = [4, 288], strides = [1, 1]} : vector<4x326xbf16> to vector<4x288xbf16>
    %5 = vector.extract_strided_slice %2 {offsets = [0, 1], sizes = [4, 288], strides = [1, 1]} : vector<4x326xbf16> to vector<4x288xbf16>
    %6 = vector.extract_strided_slice %2 {offsets = [0, 2], sizes = [4, 288], strides = [1, 1]} : vector<4x326xbf16> to vector<4x288xbf16>
    %7 = vector.extract_strided_slice %2 {offsets = [0, 18], sizes = [4, 288], strides = [1, 1]} : vector<4x326xbf16> to vector<4x288xbf16>
    %8 = vector.extract_strided_slice %2 {offsets = [0, 19], sizes = [4, 288], strides = [1, 1]} : vector<4x326xbf16> to vector<4x288xbf16>
    %9 = vector.extract_strided_slice %2 {offsets = [0, 20], sizes = [4, 288], strides = [1, 1]} : vector<4x326xbf16> to vector<4x288xbf16>
    %10 = vector.extract_strided_slice %2 {offsets = [0, 36], sizes = [4, 288], strides = [1, 1]} : vector<4x326xbf16> to vector<4x288xbf16>
    %11 = vector.extract_strided_slice %2 {offsets = [0, 37], sizes = [4, 288], strides = [1, 1]} : vector<4x326xbf16> to vector<4x288xbf16>
    %12 = vector.extract_strided_slice %2 {offsets = [0, 38], sizes = [4, 288], strides = [1, 1]} : vector<4x326xbf16> to vector<4x288xbf16>
    %13 = tpu.concatenate %4, %5, %6, %7, %8, %9, %10, %11, %12 in 0 : vector<4x288xbf16>, vector<4x288xbf16>, vector<4x288xbf16>, vector<4x288xbf16>, vector<4x288xbf16>, vector<4x288xbf16>, vector<4x288xbf16>, vector<4x288xbf16>, vector<4x288xbf16> -> vector<36x288xbf16>
    %cst = arith.constant dense<0.000000e+00> : vector<8x288xf32>
    %14 = tpu.matmul %3, %13, %cst {dimension_numbers = #tpu.dot_dimension_numbers<[1], [0], [0], [1], [0, 0, 1, 1], [], []>} : vector<8x36xbf16>, vector<36x288xbf16>, vector<8x288xf32> -> vector<8x288xf32>
    %c0_6 = arith.constant 0 : index
    %c0_7 = arith.constant 0 : index
    %15 = vector.load %arg4[%c0_6, %c0_7] : memref<8x1xf32, #tpu.memory_space<vmem>>, vector<8x1xf32>
    %c0_8 = arith.constant 0 : index
    %c0_9 = arith.constant 0 : index
    %16 = vector.load %arg5[%c0_8, %c0_9] : memref<8x1xf32, #tpu.memory_space<vmem>>, vector<8x1xf32>
    %17 = vector.broadcast %0 : vector<1x288xf32> to vector<8x288xf32>
    %18 = arith.mulf %14, %17 : vector<8x288xf32>
    %19 = vector.extract_strided_slice %18 {offsets = [0, 0], sizes = [4, 288], strides = [1, 1]} : vector<8x288xf32> to vector<4x288xf32>
    %20 = vector.shape_cast %19 : vector<4x288xf32> to vector<1x4x288xf32>
    %cst_10 = arith.constant dense<0.000000e+00> : vector<1xf32>
    %21 = vector.multi_reduction <add>, %20, %cst_10 [1, 2] : vector<1x4x288xf32> to vector<1xf32>
    %22 = vector.shape_cast %21 : vector<1xf32> to vector<1x1x1xf32>
    %23 = vector.extract %22[0, 0, 0] : f32 from vector<1x1x1xf32>
    %24 = arith.mulf %19, %19 : vector<4x288xf32>
    %25 = vector.shape_cast %24 : vector<4x288xf32> to vector<1x4x288xf32>
    %cst_11 = arith.constant dense<0.000000e+00> : vector<1xf32>
    %26 = vector.multi_reduction <add>, %25, %cst_11 [1, 2] : vector<1x4x288xf32> to vector<1xf32>
    %27 = vector.shape_cast %26 : vector<1xf32> to vector<1x1x1xf32>
    %28 = vector.extract %27[0, 0, 0] : f32 from vector<1x1x1xf32>
    %cst_12 = arith.constant 1.024000e+03 : f32
    %29 = arith.divf %23, %cst_12 : f32
    %cst_13 = arith.constant 1.024000e+03 : f32
    %30 = arith.divf %28, %cst_13 : f32
    %31 = arith.mulf %29, %29 : f32
    %32 = arith.subf %30, %31 : f32
    %cst_14 = arith.constant 9.99999974E-6 : f32
    %33 = arith.addf %32, %cst_14 : f32
    %34 = math.rsqrt %33 : f32
    %35 = vector.extract_strided_slice %15 {offsets = [0, 0], sizes = [4, 1], strides = [1, 1]} : vector<8x1xf32> to vector<4x1xf32>
    %36 = vector.broadcast %34 : f32 to vector<4x1xf32>
    %37 = arith.mulf %35, %36 : vector<4x1xf32>
    %38 = vector.extract_strided_slice %16 {offsets = [0, 0], sizes = [4, 1], strides = [1, 1]} : vector<8x1xf32> to vector<4x1xf32>
    %39 = vector.broadcast %29 : f32 to vector<4x1xf32>
    %40 = arith.mulf %39, %37 : vector<4x1xf32>
    %41 = arith.subf %38, %40 : vector<4x1xf32>
    %42 = vector.extract_strided_slice %18 {offsets = [4, 0], sizes = [4, 288], strides = [1, 1]} : vector<8x288xf32> to vector<4x288xf32>
    %43 = vector.shape_cast %42 : vector<4x288xf32> to vector<1x4x288xf32>
    %cst_15 = arith.constant dense<0.000000e+00> : vector<1xf32>
    %44 = vector.multi_reduction <add>, %43, %cst_15 [1, 2] : vector<1x4x288xf32> to vector<1xf32>
    %45 = vector.shape_cast %44 : vector<1xf32> to vector<1x1x1xf32>
    %46 = vector.extract %45[0, 0, 0] : f32 from vector<1x1x1xf32>
    %47 = arith.mulf %42, %42 : vector<4x288xf32>
    %48 = vector.shape_cast %47 : vector<4x288xf32> to vector<1x4x288xf32>
    %cst_16 = arith.constant dense<0.000000e+00> : vector<1xf32>
    %49 = vector.multi_reduction <add>, %48, %cst_16 [1, 2] : vector<1x4x288xf32> to vector<1xf32>
    %50 = vector.shape_cast %49 : vector<1xf32> to vector<1x1x1xf32>
    %51 = vector.extract %50[0, 0, 0] : f32 from vector<1x1x1xf32>
    %cst_17 = arith.constant 1.024000e+03 : f32
    %52 = arith.divf %46, %cst_17 : f32
    %cst_18 = arith.constant 1.024000e+03 : f32
    %53 = arith.divf %51, %cst_18 : f32
    %54 = arith.mulf %52, %52 : f32
    %55 = arith.subf %53, %54 : f32
    %cst_19 = arith.constant 9.99999974E-6 : f32
    %56 = arith.addf %55, %cst_19 : f32
    %57 = math.rsqrt %56 : f32
    %58 = vector.extract_strided_slice %15 {offsets = [4, 0], sizes = [4, 1], strides = [1, 1]} : vector<8x1xf32> to vector<4x1xf32>
    %59 = vector.broadcast %57 : f32 to vector<4x1xf32>
    %60 = arith.mulf %58, %59 : vector<4x1xf32>
    %61 = vector.extract_strided_slice %16 {offsets = [4, 0], sizes = [4, 1], strides = [1, 1]} : vector<8x1xf32> to vector<4x1xf32>
    %62 = vector.broadcast %52 : f32 to vector<4x1xf32>
    %63 = arith.mulf %62, %60 : vector<4x1xf32>
    %64 = arith.subf %61, %63 : vector<4x1xf32>
    %65 = tpu.concatenate %37, %60 in 0 : vector<4x1xf32>, vector<4x1xf32> -> vector<8x1xf32>
    %66 = tpu.concatenate %41, %64 in 0 : vector<4x1xf32>, vector<4x1xf32> -> vector<8x1xf32>
    %67 = vector.broadcast %65 : vector<8x1xf32> to vector<8x288xf32>
    %68 = arith.mulf %14, %67 : vector<8x288xf32>
    %69 = vector.broadcast %66 : vector<8x1xf32> to vector<8x288xf32>
    %70 = arith.addf %68, %69 : vector<8x288xf32>
    %cst_20 = arith.constant 0.000000e+00 : f32
    %71 = vector.broadcast %cst_20 : f32 to vector<8x288xf32>
    %72 = arith.maximumf %70, %71 : vector<8x288xf32>
    %73 = vector.broadcast %0 : vector<1x288xf32> to vector<8x288xf32>
    %74 = arith.mulf %72, %73 : vector<8x288xf32>
    %75 = arith.truncf %74 : vector<8x288xf32> to vector<8x288xbf16>
    %cst_21 = arith.constant 0.000000e+00 : bf16
    %76 = vector.broadcast %cst_21 : bf16 to vector<8x19xbf16>
    %77 = tpu.concatenate %76, %75, %76 in 1 : vector<8x19xbf16>, vector<8x288xbf16>, vector<8x19xbf16> -> vector<8x326xbf16>
    %c0_22 = arith.constant 0 : index
    %c0_23 = arith.constant 0 : index
    %78 = vector.load %arg6[%c0_22, %c0_23] : memref<8x72xbf16, #tpu.memory_space<vmem>>, vector<8x72xbf16>
    %79 = vector.extract_strided_slice %77 {offsets = [0, 0], sizes = [8, 288], strides = [1, 1]} : vector<8x326xbf16> to vector<8x288xbf16>
    %80 = vector.extract_strided_slice %77 {offsets = [0, 1], sizes = [8, 288], strides = [1, 1]} : vector<8x326xbf16> to vector<8x288xbf16>
    %81 = vector.extract_strided_slice %77 {offsets = [0, 2], sizes = [8, 288], strides = [1, 1]} : vector<8x326xbf16> to vector<8x288xbf16>
    %82 = vector.extract_strided_slice %77 {offsets = [0, 18], sizes = [8, 288], strides = [1, 1]} : vector<8x326xbf16> to vector<8x288xbf16>
    %83 = vector.extract_strided_slice %77 {offsets = [0, 19], sizes = [8, 288], strides = [1, 1]} : vector<8x326xbf16> to vector<8x288xbf16>
    %84 = vector.extract_strided_slice %77 {offsets = [0, 20], sizes = [8, 288], strides = [1, 1]} : vector<8x326xbf16> to vector<8x288xbf16>
    %85 = vector.extract_strided_slice %77 {offsets = [0, 36], sizes = [8, 288], strides = [1, 1]} : vector<8x326xbf16> to vector<8x288xbf16>
    %86 = vector.extract_strided_slice %77 {offsets = [0, 37], sizes = [8, 288], strides = [1, 1]} : vector<8x326xbf16> to vector<8x288xbf16>
    %87 = vector.extract_strided_slice %77 {offsets = [0, 38], sizes = [8, 288], strides = [1, 1]} : vector<8x326xbf16> to vector<8x288xbf16>
    %88 = tpu.concatenate %79, %80, %81, %82, %83, %84, %85, %86, %87 in 0 : vector<8x288xbf16>, vector<8x288xbf16>, vector<8x288xbf16>, vector<8x288xbf16>, vector<8x288xbf16>, vector<8x288xbf16>, vector<8x288xbf16>, vector<8x288xbf16>, vector<8x288xbf16> -> vector<72x288xbf16>
    %cst_24 = arith.constant dense<0.000000e+00> : vector<8x288xf32>
    %89 = tpu.matmul %78, %88, %cst_24 {dimension_numbers = #tpu.dot_dimension_numbers<[1], [0], [0], [1], [0, 0, 1, 1], [], []>} : vector<8x72xbf16>, vector<72x288xbf16>, vector<8x288xf32> -> vector<8x288xf32>
    %c0_25 = arith.constant 0 : index
    %c0_26 = arith.constant 0 : index
    %90 = vector.load %arg7[%c0_25, %c0_26] : memref<8x1xf32, #tpu.memory_space<vmem>>, vector<8x1xf32>
    %c0_27 = arith.constant 0 : index
    %c0_28 = arith.constant 0 : index
    %91 = vector.load %arg8[%c0_27, %c0_28] : memref<8x1xf32, #tpu.memory_space<vmem>>, vector<8x1xf32>
    %92 = vector.broadcast %0 : vector<1x288xf32> to vector<8x288xf32>
    %93 = arith.mulf %89, %92 : vector<8x288xf32>
    %94 = vector.extract_strided_slice %93 {offsets = [0, 0], sizes = [4, 288], strides = [1, 1]} : vector<8x288xf32> to vector<4x288xf32>
    %95 = vector.shape_cast %94 : vector<4x288xf32> to vector<1x4x288xf32>
    %cst_29 = arith.constant dense<0.000000e+00> : vector<1xf32>
    %96 = vector.multi_reduction <add>, %95, %cst_29 [1, 2] : vector<1x4x288xf32> to vector<1xf32>
    %97 = vector.shape_cast %96 : vector<1xf32> to vector<1x1x1xf32>
    %98 = vector.extract %97[0, 0, 0] : f32 from vector<1x1x1xf32>
    %99 = arith.mulf %94, %94 : vector<4x288xf32>
    %100 = vector.shape_cast %99 : vector<4x288xf32> to vector<1x4x288xf32>
    %cst_30 = arith.constant dense<0.000000e+00> : vector<1xf32>
    %101 = vector.multi_reduction <add>, %100, %cst_30 [1, 2] : vector<1x4x288xf32> to vector<1xf32>
    %102 = vector.shape_cast %101 : vector<1xf32> to vector<1x1x1xf32>
    %103 = vector.extract %102[0, 0, 0] : f32 from vector<1x1x1xf32>
    %cst_31 = arith.constant 1.024000e+03 : f32
    %104 = arith.divf %98, %cst_31 : f32
    %cst_32 = arith.constant 1.024000e+03 : f32
    %105 = arith.divf %103, %cst_32 : f32
    %106 = arith.mulf %104, %104 : f32
    %107 = arith.subf %105, %106 : f32
    %cst_33 = arith.constant 9.99999974E-6 : f32
    %108 = arith.addf %107, %cst_33 : f32
    %109 = math.rsqrt %108 : f32
    %110 = vector.extract_strided_slice %90 {offsets = [0, 0], sizes = [4, 1], strides = [1, 1]} : vector<8x1xf32> to vector<4x1xf32>
    %111 = vector.broadcast %109 : f32 to vector<4x1xf32>
    %112 = arith.mulf %110, %111 : vector<4x1xf32>
    %113 = vector.extract_strided_slice %91 {offsets = [0, 0], sizes = [4, 1], strides = [1, 1]} : vector<8x1xf32> to vector<4x1xf32>
    %114 = vector.broadcast %104 : f32 to vector<4x1xf32>
    %115 = arith.mulf %114, %112 : vector<4x1xf32>
    %116 = arith.subf %113, %115 : vector<4x1xf32>
    %117 = vector.extract_strided_slice %93 {offsets = [4, 0], sizes = [4, 288], strides = [1, 1]} : vector<8x288xf32> to vector<4x288xf32>
    %118 = vector.shape_cast %117 : vector<4x288xf32> to vector<1x4x288xf32>
    %cst_34 = arith.constant dense<0.000000e+00> : vector<1xf32>
    %119 = vector.multi_reduction <add>, %118, %cst_34 [1, 2] : vector<1x4x288xf32> to vector<1xf32>
    %120 = vector.shape_cast %119 : vector<1xf32> to vector<1x1x1xf32>
    %121 = vector.extract %120[0, 0, 0] : f32 from vector<1x1x1xf32>
    %122 = arith.mulf %117, %117 : vector<4x288xf32>
    %123 = vector.shape_cast %122 : vector<4x288xf32> to vector<1x4x288xf32>
    %cst_35 = arith.constant dense<0.000000e+00> : vector<1xf32>
    %124 = vector.multi_reduction <add>, %123, %cst_35 [1, 2] : vector<1x4x288xf32> to vector<1xf32>
    %125 = vector.shape_cast %124 : vector<1xf32> to vector<1x1x1xf32>
    %126 = vector.extract %125[0, 0, 0] : f32 from vector<1x1x1xf32>
    %cst_36 = arith.constant 1.024000e+03 : f32
    %127 = arith.divf %121, %cst_36 : f32
    %cst_37 = arith.constant 1.024000e+03 : f32
    %128 = arith.divf %126, %cst_37 : f32
    %129 = arith.mulf %127, %127 : f32
    %130 = arith.subf %128, %129 : f32
    %cst_38 = arith.constant 9.99999974E-6 : f32
    %131 = arith.addf %130, %cst_38 : f32
    %132 = math.rsqrt %131 : f32
    %133 = vector.extract_strided_slice %90 {offsets = [4, 0], sizes = [4, 1], strides = [1, 1]} : vector<8x1xf32> to vector<4x1xf32>
    %134 = vector.broadcast %132 : f32 to vector<4x1xf32>
    %135 = arith.mulf %133, %134 : vector<4x1xf32>
    %136 = vector.extract_strided_slice %91 {offsets = [4, 0], sizes = [4, 1], strides = [1, 1]} : vector<8x1xf32> to vector<4x1xf32>
    %137 = vector.broadcast %127 : f32 to vector<4x1xf32>
    %138 = arith.mulf %137, %135 : vector<4x1xf32>
    %139 = arith.subf %136, %138 : vector<4x1xf32>
    %140 = tpu.concatenate %112, %135 in 0 : vector<4x1xf32>, vector<4x1xf32> -> vector<8x1xf32>
    %141 = tpu.concatenate %116, %139 in 0 : vector<4x1xf32>, vector<4x1xf32> -> vector<8x1xf32>
    %142 = vector.broadcast %140 : vector<8x1xf32> to vector<8x288xf32>
    %143 = arith.mulf %89, %142 : vector<8x288xf32>
    %144 = vector.broadcast %141 : vector<8x1xf32> to vector<8x288xf32>
    %145 = arith.addf %143, %144 : vector<8x288xf32>
    %cst_39 = arith.constant 0.000000e+00 : f32
    %146 = vector.broadcast %cst_39 : f32 to vector<8x288xf32>
    %147 = arith.maximumf %145, %146 : vector<8x288xf32>
    %c0_40 = arith.constant 0 : index
    %c0_41 = arith.constant 0 : index
    %c0_42 = arith.constant 0 : index
    %148 = vector.load %arg9[%c0_40, %c0_41, %c0_42] : memref<1x8x288xf32, #tpu.memory_space<vmem>>, vector<1x8x288xf32>
    %149 = vector.shape_cast %148 : vector<1x8x288xf32> to vector<8x288xf32>
    %150 = vector.shape_cast %147 : vector<8x288xf32> to vector<1x8x288xf32>
    tpu.vector_store %arg9[%c0_40, %c0_41, %c0_42], %150 {strides = array<i32>} : memref<1x8x288xf32, #tpu.memory_space<vmem>>, vector<1x8x288xf32>,
    return
  }
  func.func @transform_0(%arg0: i32) -> (i32, i32) {
    %c0_i32 = arith.constant 0 : i32
    %c0_i32_0 = arith.constant 0 : i32
    %c0_i32_1 = arith.constant 0 : i32
    return %c0_i32, %c0_i32_0 : i32, i32
  }
  func.func @transform_1(%arg0: i32) -> (i32, i32, i32) {
    %c0_i32 = arith.constant 0 : i32
    %c0_i32_0 = arith.constant 0 : i32
    %c0_i32_1 = arith.constant 0 : i32
    return %arg0, %c0_i32, %c0_i32_0 : i32, i32, i32
  }
  func.func @transform_2(%arg0: i32) -> (i32, i32) {
    %c0_i32 = arith.constant 0 : i32
    %c0_i32_0 = arith.constant 0 : i32
    %c0_i32_1 = arith.constant 0 : i32
    return %c0_i32, %c0_i32_0 : i32, i32
  }
  func.func @transform_3(%arg0: i32) -> (i32, i32) {
    %c0_i32 = arith.constant 0 : i32
    %c0_i32_0 = arith.constant 0 : i32
    %c0_i32_1 = arith.constant 0 : i32
    return %c0_i32, %c0_i32_0 : i32, i32
  }
  func.func @transform_4(%arg0: i32) -> (i32, i32) {
    %c0_i32 = arith.constant 0 : i32
    %c0_i32_0 = arith.constant 0 : i32
    %c0_i32_1 = arith.constant 0 : i32
    return %c0_i32, %c0_i32_0 : i32, i32
  }
  func.func @transform_5(%arg0: i32) -> (i32, i32) {
    %c0_i32 = arith.constant 0 : i32
    %c0_i32_0 = arith.constant 0 : i32
    %c0_i32_1 = arith.constant 0 : i32
    return %c0_i32, %c0_i32_0 : i32, i32
  }
  func.func @transform_6(%arg0: i32) -> (i32, i32) {
    %c0_i32 = arith.constant 0 : i32
    %c0_i32_0 = arith.constant 0 : i32
    %c0_i32_1 = arith.constant 0 : i32
    return %c0_i32, %c0_i32_0 : i32, i32
  }
  func.func @transform_7(%arg0: i32) -> (i32, i32) {
    %c0_i32 = arith.constant 0 : i32
    %c0_i32_0 = arith.constant 0 : i32
    %c0_i32_1 = arith.constant 0 : i32
    return %c0_i32, %c0_i32_0 : i32, i32
  }
  func.func @transform_8(%arg0: i32) -> (i32, i32, i32) {
    %c0_i32 = arith.constant 0 : i32
    %c0_i32_0 = arith.constant 0 : i32
    %c0_i32_1 = arith.constant 0 : i32
    return %arg0, %c0_i32, %c0_i32_0 : i32, i32, i32
  }
}

</mosaic_0001>

<llo_original>
// kernel: tpu_custom_call.1
$region0: #{tpu_custom_call.1}
  #allocation0 [shape = 'u32[]', space=smem, size = 0x4, offset = 0x4, fixed_abs, tag = 'smem constant byte address 0x4 - core index']
  #allocation1 [shape = 'u32[144,128]{1,0:T(1,128)}', space=vmem, size = 0x12000, scoped, tag = 'internal scratch']
  %s0 = inlined_call_operand.vmem [shape: f32[1,288], index: 0, kind: input, shape index: {}]
  %s1 = inlined_call_operand.vmem [shape: bf16[2,4,326], index: 1, kind: input, shape index: {}]
  %s2 = inlined_call_operand.vmem [shape: bf16[8,36], index: 2, kind: input, shape index: {}]
  %s3 = inlined_call_operand.vmem [shape: f32[8,1], index: 3, kind: input, shape index: {}]
  %s4 = inlined_call_operand.vmem [shape: f32[8,1], index: 4, kind: input, shape index: {}]
  %s5 = inlined_call_operand.vmem [shape: bf16[8,72], index: 5, kind: input, shape index: {}]
  %s6 = inlined_call_operand.vmem [shape: f32[8,1], index: 6, kind: input, shape index: {}]
  %s7 = inlined_call_operand.vmem [shape: f32[8,1], index: 7, kind: input, shape index: {}]
  %s8 = inlined_call_operand.hbm [shape: f32[2,8,288], index: 8, kind: output, shape index: {}]
  %s9 = sld [smem:[#allocation0]]
  $region65: #{tpu_custom_call.1} parent=0
    _
  %s11 = ssub.s32 1, %s9
  %s12 = scalar_select 0, %s11, %s9
  $region1: #{tpu_custom_call.1} parent=0
    #allocation2 [shape = 'u8[24576]{0}', space=vmem, size = 0x6000, scoped, tag = 'output window, operand 0']
    #allocation3 [shape = 's32[2]{0}', space=sflag, size = 0x8, scoped, tag = 'scoped memory for tpu_custom_call.1']
    %13 = vsyncpa [#allocation3], 0
    %s14 = scalar_lea.sflag [#allocation3], 1
    %15 = vsyncpa %s14, 0
    loop: start=0, step=1, limit=4
    $region2: #{tpu_custom_call.1} parent=1 // loop_pre_header
      _
    $region3: #{tpu_custom_call.1} parent=1 // loop_header
      %s17 = sphi 0, %s21
      %p18 = scmp.ge.s32.totalorder %s17, 4
      %s25 = sphi 0, %s25
      %s27 = sphi 0, %s25
      %s28 = sphi 0, %s27
      %s42 = sphi 0, %s28
      %s48 = sphi 0, %s50
      %s51 = sphi 0, %s48
      %s52 = sphi 0, %s51
      %s68 = sphi 0, %s52
      %s72 = sphi 0, %s72
      %s74 = sphi 0, %s72
      %s75 = sphi 0, %s74
      %s89 = sphi 0, %s75
      %s93 = sphi 0, %s93
      %s95 = sphi 0, %s93
      %s96 = sphi 0, %s95
      %s110 = sphi 0, %s96
      %s114 = sphi 0, %s114
      %s116 = sphi 0, %s114
      %s117 = sphi 0, %s116
      %s131 = sphi 0, %s117
      %s135 = sphi 0, %s135
      %s137 = sphi 0, %s135
      %s138 = sphi 0, %s137
      %s152 = sphi 0, %s138
      %s156 = sphi 0, %s156
      %s158 = sphi 0, %s156
      %s159 = sphi 0, %s158
      %s173 = sphi 0, %s159
      %s177 = sphi 0, %s177
      %s179 = sphi 0, %s177
      %s180 = sphi 0, %s179
      %s194 = sphi 0, %s180
      %s200 = sphi 0, %s202
      %s203 = sphi 0, %s200
      %s204 = sphi 0, %s203
      %s220 = sphi 0, %s204
    $region4: #{tpu_custom_call.1} parent=1 // loop_header_branch
      %20 = sbr.rel (%p18) target = $region8
    $region5: #{tpu_custom_call.1} parent=1 // loop_body
      %s22 = ssub.s32 %s17, 1
      %s23 = ssub.s32 %s17, 2
      %s24 = sadd.s32 %s17, 1
      %s26 = sadd.s32 %s25, 1
      %p29 = scmp.eq.s32.totalorder %s17, 1
      %p30 = scmp.ne.s32.totalorder %s25, %s27
      %p31 = scmp.eq.s32.totalorder %s17, 0
      %p32 = por %p30, %p31
      %p33 = scmp.ne.s32.totalorder %s25, %s27
      %p34 = scmp.eq.s32.totalorder %s22, 1
      %p35 = por %p33, %p34
      %p36 = scmp.ne.s32.totalorder %s27, %s28
      %p37 = scmp.eq.s32.totalorder %s22, 0
      %p38 = por %p36, %p37
      %p39 = scmp.ne.s32.totalorder %s27, %s28
      %p40 = scmp.eq.s32.totalorder %s23, 1
      %p41 = por %p39, %p40
      %p43 = scmp.ne.s32.totalorder %s28, %s42
      %p44 = scmp.eq.s32.totalorder %s23, 0
      %p45 = por %p43, %p44
      %s46 = ssub.s32 %s17, %s24
      %p47 = scmp.eq.s32.totalorder %s46, 0
      %s49 = sadd.s32 %s48, 1
      %s50 = scalar_select %p47, %s48, %s49
      %p53 = pneg %p47
      %p54 = scmp.eq.s32.totalorder %s17, 1
      %p55 = por %p53, %p54
      %p56 = scmp.ne.s32.totalorder %s48, %s51
      %p57 = scmp.eq.s32.totalorder %s17, 0
      %p58 = por %p56, %p57
      %p59 = scmp.ne.s32.totalorder %s48, %s51
      %p60 = scmp.eq.s32.totalorder %s22, 1
      %p61 = por %p59, %p60
      %p62 = scmp.ne.s32.totalorder %s51, %s52
      %p63 = scmp.eq.s32.totalorder %s22, 0
      %p64 = por %p62, %p63
      %p65 = scmp.ne.s32.totalorder %s51, %s52
      %p66 = scmp.eq.s32.totalorder %s23, 1
      %p67 = por %p65, %p66
      %p69 = scmp.ne.s32.totalorder %s52, %s68
      %p70 = scmp.eq.s32.totalorder %s23, 0
      %p71 = por %p69, %p70
      %s73 = sadd.s32 %s72, 1
      %p76 = scmp.eq.s32.totalorder %s17, 1
      %p77 = scmp.ne.s32.totalorder %s72, %s74
      %p78 = scmp.eq.s32.totalorder %s17, 0
      %p79 = por %p77, %p78
      %p80 = scmp.ne.s32.totalorder %s72, %s74
      %p81 = scmp.eq.s32.totalorder %s22, 1
      %p82 = por %p80, %p81
      %p83 = scmp.ne.s32.totalorder %s74, %s75
      %p84 = scmp.eq.s32.totalorder %s22, 0
      %p85 = por %p83, %p84
      %p86 = scmp.ne.s32.totalorder %s74, %s75
      %p87 = scmp.eq.s32.totalorder %s23, 1
      %p88 = por %p86, %p87
      %p90 = scmp.ne.s32.totalorder %s75, %s89
      %p91 = scmp.eq.s32.totalorder %s23, 0
      %p92 = por %p90, %p91
      %s94 = sadd.s32 %s93, 1
      %p97 = scmp.eq.s32.totalorder %s17, 1
      %p98 = scmp.ne.s32.totalorder %s93, %s95
      %p99 = scmp.eq.s32.totalorder %s17, 0
      %p100 = por %p98, %p99
      %p101 = scmp.ne.s32.totalorder %s93, %s95
      %p102 = scmp.eq.s32.totalorder %s22, 1
      %p103 = por %p101, %p102
      %p104 = scmp.ne.s32.totalorder %s95, %s96
      %p105 = scmp.eq.s32.totalorder %s22, 0
      %p106 = por %p104, %p105
      %p107 = scmp.ne.s32.totalorder %s95, %s96
      %p108 = scmp.eq.s32.totalorder %s23, 1
      %p109 = por %p107, %p108
      %p111 = scmp.ne.s32.totalorder %s96, %s110
      %p112 = scmp.eq.s32.totalorder %s23, 0
      %p113 = por %p111, %p112
      %s115 = sadd.s32 %s114, 1
      %p118 = scmp.eq.s32.totalorder %s17, 1
      %p119 = scmp.ne.s32.totalorder %s114, %s116
      %p120 = scmp.eq.s32.totalorder %s17, 0
      %p121 = por %p119, %p120
      %p122 = scmp.ne.s32.totalorder %s114, %s116
      %p123 = scmp.eq.s32.totalorder %s22, 1
      %p124 = por %p122, %p123
      %p125 = scmp.ne.s32.totalorder %s116, %s117
      %p126 = scmp.eq.s32.totalorder %s22, 0
      %p127 = por %p125, %p126
      %p128 = scmp.ne.s32.totalorder %s116, %s117
      %p129 = scmp.eq.s32.totalorder %s23, 1
      %p130 = por %p128, %p129
      %p132 = scmp.ne.s32.totalorder %s117, %s131
      %p133 = scmp.eq.s32.totalorder %s23, 0
      %p134 = por %p132, %p133
      %s136 = sadd.s32 %s135, 1
      %p139 = scmp.eq.s32.totalorder %s17, 1
      %p140 = scmp.ne.s32.totalorder %s135, %s137
      %p141 = scmp.eq.s32.totalorder %s17, 0
      %p142 = por %p140, %p141
      %p143 = scmp.ne.s32.totalorder %s135, %s137
      %p144 = scmp.eq.s32.totalorder %s22, 1
      %p145 = por %p143, %p144
      %p146 = scmp.ne.s32.totalorder %s137, %s138
      %p147 = scmp.eq.s32.totalorder %s22, 0
      %p148 = por %p146, %p147
      %p149 = scmp.ne.s32.totalorder %s137, %s138
      %p150 = scmp.eq.s32.totalorder %s23, 1
      %p151 = por %p149, %p150
      %p153 = scmp.ne.s32.totalorder %s138, %s152
      %p154 = scmp.eq.s32.totalorder %s23, 0
      %p155 = por %p153, %p154
      %s157 = sadd.s32 %s156, 1
      %p160 = scmp.eq.s32.totalorder %s17, 1
      %p161 = scmp.ne.s32.totalorder %s156, %s158
      %p162 = scmp.eq.s32.totalorder %s17, 0
      %p163 = por %p161, %p162
      %p164 = scmp.ne.s32.totalorder %s156, %s158
      %p165 = scmp.eq.s32.totalorder %s22, 1
      %p166 = por %p164, %p165
      %p167 = scmp.ne.s32.totalorder %s158, %s159
      %p168 = scmp.eq.s32.totalorder %s22, 0
      %p169 = por %p167, %p168
      %p170 = scmp.ne.s32.totalorder %s158, %s159
      %p171 = scmp.eq.s32.totalorder %s23, 1
      %p172 = por %p170, %p171
      %p174 = scmp.ne.s32.totalorder %s159, %s173
      %p175 = scmp.eq.s32.totalorder %s23, 0
      %p176 = por %p174, %p175
      %s178 = sadd.s32 %s177, 1
      %p181 = scmp.eq.s32.totalorder %s17, 1
      %p182 = scmp.ne.s32.totalorder %s177, %s179
      %p183 = scmp.eq.s32.totalorder %s17, 0
      %p184 = por %p182, %p183
      %p185 = scmp.ne.s32.totalorder %s177, %s179
      %p186 = scmp.eq.s32.totalorder %s22, 1
      %p187 = por %p185, %p186
      %p188 = scmp.ne.s32.totalorder %s179, %s180
      %p189 = scmp.eq.s32.totalorder %s22, 0
      %p190 = por %p188, %p189
      %p191 = scmp.ne.s32.totalorder %s179, %s180
      %p192 = scmp.eq.s32.totalorder %s23, 1
      %p193 = por %p191, %p192
      %p195 = scmp.ne.s32.totalorder %s180, %s194
      %p196 = scmp.eq.s32.totalorder %s23, 0
      %p197 = por %p195, %p196
      %s198 = ssub.s32 %s17, %s24
      %p199 = scmp.eq.s32.totalorder %s198, 0
      %s201 = sadd.s32 %s200, 1
      %s202 = scalar_select %p199, %s200, %s201
      %p205 = pneg %p199
      %p206 = scmp.eq.s32.totalorder %s17, 1
      %p207 = por %p205, %p206
      %p208 = scmp.ne.s32.totalorder %s200, %s203
      %p209 = scmp.eq.s32.totalorder %s17, 0
      %p210 = por %p208, %p209
      %p211 = scmp.ne.s32.totalorder %s200, %s203
      %p212 = scmp.eq.s32.totalorder %s22, 1
      %p213 = por %p211, %p212
      %p214 = scmp.ne.s32.totalorder %s203, %s204
      %p215 = scmp.eq.s32.totalorder %s22, 0
      %p216 = por %p214, %p215
      %p217 = scmp.ne.s32.totalorder %s203, %s204
      %p218 = scmp.eq.s32.totalorder %s23, 1
      %p219 = por %p217, %p218
      %p221 = scmp.ne.s32.totalorder %s204, %s220
      %p222 = scmp.eq.s32.totalorder %s23, 0
      %p223 = por %p221, %p222
      %p224 = scmp.le.s32.totalorder 1, %s17
      %p225 = scmp.lt.s32.totalorder %s17, 3
      %p226 = pnand %p224, %p225
      %p227 = pneg %p226
      // Predicated region
      $region9: #{tpu_custom_call.1} parent=5 // pred_check
        _
      $region10: #{tpu_custom_call.1} parent=5 // pred_check_branch
        %229 = sbr.rel (%p226) target = $region12
      $region11: #{tpu_custom_call.1} parent=5 // pred_region
        %s230 = ssub.s32 %s17, 1
        // Predicated region
        $region13: #{tpu_custom_call.1} parent=11 // pred_check
          %p231 = pneg %p38
        $region14: #{tpu_custom_call.1} parent=11 // pred_check_branch
          %233 = sbr.rel (%p231) target = $region16
        $region15: #{tpu_custom_call.1} parent=11 // pred_region
          _
        $region16: #{tpu_custom_call.1} parent=11 // pred_fallthru
          _
        // Predicated region
        $region17: #{tpu_custom_call.1} parent=11 // pred_check
          %p234 = pneg %p85
        $region18: #{tpu_custom_call.1} parent=11 // pred_check_branch
          %236 = sbr.rel (%p234) target = $region20
        $region19: #{tpu_custom_call.1} parent=11 // pred_region
          _
        $region20: #{tpu_custom_call.1} parent=11 // pred_fallthru
          _
        // Predicated region
        $region21: #{tpu_custom_call.1} parent=11 // pred_check
          %p237 = pneg %p106
        $region22: #{tpu_custom_call.1} parent=11 // pred_check_branch
          %239 = sbr.rel (%p237) target = $region24
        $region23: #{tpu_custom_call.1} parent=11 // pred_region
          _
        $region24: #{tpu_custom_call.1} parent=11 // pred_fallthru
          _
        // Predicated region
        $region25: #{tpu_custom_call.1} parent=11 // pred_check
          %p240 = pneg %p127
        $region26: #{tpu_custom_call.1} parent=11 // pred_check_branch
          %242 = sbr.rel (%p240) target = $region28
        $region27: #{tpu_custom_call.1} parent=11 // pred_region
          _
        $region28: #{tpu_custom_call.1} parent=11 // pred_fallthru
          _
        // Predicated region
        $region29: #{tpu_custom_call.1} parent=11 // pred_check
          %p243 = pneg %p148
        $region30: #{tpu_custom_call.1} parent=11 // pred_check_branch
          %245 = sbr.rel (%p243) target = $region32
        $region31: #{tpu_custom_call.1} parent=11 // pred_region
          _
        $region32: #{tpu_custom_call.1} parent=11 // pred_fallthru
          _
        // Predicated region
        $region33: #{tpu_custom_call.1} parent=11 // pred_check
          %p246 = pneg %p169
        $region34: #{tpu_custom_call.1} parent=11 // pred_check_branch
          %248 = sbr.rel (%p246) target = $region36
        $region35: #{tpu_custom_call.1} parent=11 // pred_region
          _
        $region36: #{tpu_custom_call.1} parent=11 // pred_fallthru
          _
        // Predicated region
        $region37: #{tpu_custom_call.1} parent=11 // pred_check
          %p249 = pneg %p190
        $region38: #{tpu_custom_call.1} parent=11 // pred_check_branch
          %251 = sbr.rel (%p249) target = $region40
        $region39: #{tpu_custom_call.1} parent=11 // pred_region
          _
        $region40: #{tpu_custom_call.1} parent=11 // pred_fallthru
          _
      $region12: #{tpu_custom_call.1} parent=5 // pred_fallthru
        _
      %p252 = scmp.lt.s32.totalorder %s17, 2
      // Predicated region
      $region41: #{tpu_custom_call.1} parent=5 // pred_check
        %p253 = pneg %p252
      $region42: #{tpu_custom_call.1} parent=5 // pred_check_branch
        %255 = sbr.rel (%p253) target = $region44
      $region43: #{tpu_custom_call.1} parent=5 // pred_region
        // Predicated region
        $region45: #{tpu_custom_call.1} parent=43 // pred_check
          %p256 = pneg %p58
        $region46: #{tpu_custom_call.1} parent=43 // pred_check_branch
          %258 = sbr.rel (%p256) target = $region48
        $region47: #{tpu_custom_call.1} parent=43 // pred_region
          %p259 = scmp.lt.s32.totalorder %s17, 1
          %s260 = scalar_select %p259, %s17, 1
          %s261 = smul.addr %s260, 3
          %s262 = smul.addr %s261, 2
          %s263 = scalar_lea.vmem %s1, %s262
        $region48: #{tpu_custom_call.1} parent=43 // pred_fallthru
          _
      $region44: #{tpu_custom_call.1} parent=5 // pred_fallthru
        _
      %p264 = scmp.le.s32.totalorder 1, %s17
      %p265 = scmp.lt.s32.totalorder %s17, 3
      %p266 = pnand %p264, %p265
      %p267 = pneg %p266
      // Predicated region
      $region49: #{tpu_custom_call.1} parent=5 // pred_check
        _
      $region50: #{tpu_custom_call.1} parent=5 // pred_check_branch
        %269 = sbr.rel (%p266) target = $region52
      $region51: #{tpu_custom_call.1} parent=5 // pred_region
        %s270 = ssub.s32 %s17, 1
        %p271 = pneg %p38
        %p272 = pneg %p35
        %p273 = scmp.lt.s32.totalorder %s22, 1
        %s274 = scalar_select %p273, %s22, 1
        %s275 = smul.addr %s274, 3
        %s276 = smul.addr %s275, 2
        %s277 = scalar_lea.vmem %s1, %s276
        %p278 = pneg %p64
        %p279 = pneg %p61
        %p280 = pneg %p85
        %p281 = pneg %p82
        %p282 = pneg %p106
        %p283 = pneg %p103
        %p284 = pneg %p127
        %p285 = pneg %p124
        %p286 = pneg %p148
        %p287 = pneg %p145
        %p288 = pneg %p169
        %p289 = pneg %p166
        %p290 = pneg %p190
        %p291 = pneg %p187
        %p292 = pneg %p216
        %p293 = pneg %p213
        %s294 = sand.u32 %s203, 1
        %s295 = scalar_lea.sflag [#allocation3], %s294
        %s296 = sand.u32 %s203, 1
        %s297 = smul.addr %s296, 24
        %s298 = scalar_lea.vmem [#allocation2], %s297
        %p299 = scmp.lt.s32.totalorder %s22, 1
        %s300 = scalar_select %p299, %s22, 1
        %s301 = smul.addr %s300, 3
        %s302 = smul.addr %s301, 2
        %s303 = scalar_lea.vmem %s1, %s302
        %v305 = vld [vmem:[%s0] sm:$0x7]
        %v306 = vld [vmem:[%s303] sm:$0x3f]
        %v307 = vld [vmem:[%s2] sm:$0xf]
        %v309 = vcombine.high %v306, %v306
        %v311 = vunpack.c.l.s4 1983009808
        %v312 = vunpack.c.0.s8 %v311
        %v313 = vlaneseq
        %v314 = vshrl.u32 %v313, 7
        %v315 = vsub.s32 %v312, %v314
        %v316 = vrot.slane %v306, %v315
        %v318 = vunpack.c.l.s4 1983009808
        %v319 = vunpack.c.0.s8 %v318
        %v320 = vlaneseq
        %v321 = vshrl.u32 %v320, 7
        %v322 = vsub.s32 %v319, %v321
        %v323 = vrot.slane %v309, %v322
        %v324 = vcombine.high %v316, %v316
        %v325 = vcombine.low %v306, %v306
        %v327 = vunpack.c.l.s4 1983009808
        %v328 = vunpack.c.0.s8 %v327
        %v329 = vlaneseq
        %v330 = vshrl.u32 %v329, 7
        %v331 = vsub.s32 %v328, %v330
        %v332 = vrot.slane %v325, %v331
        %v333 = vcombine.high %v332, %v332
        %334 = vrot.lane.b32.xlu0 %v332, 127
        %v335 = vpop.permute.xlu0 %334
        %336 = vrot.lane.b32.xlu0 %v333, 127
        %v337 = vpop.permute.xlu0 %336
        %338 = vrot.lane.b32.xlu0 %v316, 127
        %v339 = vpop.permute.xlu0 %338
        %vm340 = vcmask 1039360
        %v341 = vsel %vm340, %v335, %v337
        %v342 = vsel %vm340, %v337, %v339
        %v343 = vcombine.low %v316, %v316
        %v344 = vcombine.low %v323, %v323
        %345 = vrot.lane.b32.xlu0 %v343, 126
        %v346 = vpop.permute.xlu0 %345
        %347 = vrot.lane.b32.xlu0 %v316, 126
        %v348 = vpop.permute.xlu0 %347
        %349 = vrot.lane.b32.xlu0 %v344, 126
        %v350 = vpop.permute.xlu0 %349
        %vm351 = vcmask 1031168
        %v352 = vsel %vm351, %v346, %v348
        %v353 = vsel %vm351, %v348, %v350
        %v354 = vcombine.low %v332, %v332
        %355 = vrot.lane.b32.xlu0 %v354, 110
        %v356 = vpop.permute.xlu0 %355
        %357 = vrot.lane.b32.xlu0 %v332, 110
        %v358 = vpop.permute.xlu0 %357
        %359 = vrot.lane.b32.xlu0 %v343, 110
        %v360 = vpop.permute.xlu0 %359
        %vm361 = vcmask 900096
        %v362 = vsel %vm361, %v356, %v358
        %v363 = vsel %vm361, %v358, %v360
        %364 = vrot.lane.b32.xlu0 %v316, 109
        %v365 = vpop.permute.xlu0 %364
        %366 = vrot.lane.b32.xlu0 %v324, 109
        %v367 = vpop.permute.xlu0 %366
        %368 = vrot.lane.b32.xlu0 %v323, 109
        %v369 = vpop.permute.xlu0 %368
        %vm370 = vcmask 891904
        %v371 = vsel %vm370, %v365, %v367
        %v372 = vsel %vm370, %v367, %v369
        %373 = vrot.lane.b32.xlu0 %v332, 108
        %v374 = vpop.permute.xlu0 %373
        %375 = vrot.lane.b32.xlu0 %v333, 108
        %v376 = vpop.permute.xlu0 %375
        %377 = vrot.lane.b32.xlu0 %v316, 108
        %v378 = vpop.permute.xlu0 %377
        %vm379 = vcmask 883712
        %v380 = vsel %vm379, %v374, %v376
        %v381 = vsel %vm379, %v376, %v378
        %382 = vrot.lane.b32.xlu0 %v343, 92
        %v383 = vpop.permute.xlu0 %382
        %384 = vrot.lane.b32.xlu0 %v316, 92
        %v385 = vpop.permute.xlu0 %384
        %386 = vrot.lane.b32.xlu0 %v344, 92
        %v387 = vpop.permute.xlu0 %386
        %vm388 = vcmask 752640
        %v389 = vsel %vm388, %v383, %v385
        %v390 = vsel %vm388, %v385, %v387
        %391 = vrot.lane.b32.xlu0 %v354, 91
        %v392 = vpop.permute.xlu0 %391
        %393 = vrot.lane.b32.xlu0 %v332, 91
        %v394 = vpop.permute.xlu0 %393
        %395 = vrot.lane.b32.xlu0 %v343, 91
        %v396 = vpop.permute.xlu0 %395
        %vm397 = vcmask 744448
        %v398 = vsel %vm397, %v392, %v394
        %v399 = vsel %vm397, %v394, %v396
        %400 = vrot.lane.b32.xlu0 %v316, 90
        %v401 = vpop.permute.xlu0 %400
        %402 = vrot.lane.b32.xlu0 %v324, 90
        %v403 = vpop.permute.xlu0 %402
        %404 = vrot.lane.b32.xlu0 %v323, 90
        %v405 = vpop.permute.xlu0 %404
        %vm406 = vcmask 736256
        %v407 = vsel %vm406, %v401, %v403
        %v408 = vsel %vm406, %v403, %v405
        %vm409 = vcmask 1041408
        %v412 = vsel %vm409, %v316, %v341
        %v415 = vsel %vm409, %v324, %v342
        %v418 = vsel %vm409, %v323, %v339
        %vm419 = vcmask 1043456
        %v421 = vsel %vm419, %v412, %v352
        %v423 = vsel %vm419, %v415, %v353
        %v425 = vsel %vm419, %v418, %v350
        %vm426 = vcmask 1045504
        %v428 = vsel %vm426, %v421, %v362
        %v431 = vsel %vm426, %v423, %v363
        %v434 = vsel %vm426, %v425, %v360
        %v438 = vsel %vm409, %v371, %v380
        %v441 = vsel %vm409, %v372, %v381
        %v444 = vsel %vm409, %v369, %v378
        %v446 = vsel %vm419, %v438, %v389
        %v448 = vsel %vm419, %v441, %v390
        %v450 = vsel %vm419, %v444, %v387
        %v452 = vsel %vm426, %v446, %v398
        %v455 = vsel %vm426, %v448, %v399
        %v458 = vsel %vm426, %v450, %v396
        %vm460 = vcmask 293888
        %v462 = vsel %vm460, %v307, 0
        %v465 = vsel %vm409, %v407, 0
        %v468 = vsel %vm409, %v408, 0
        %v471 = vsel %vm409, %v405, 0
        %473 = vmatprep.subr.bf16.mxu0 %v431
        %474 = vmatpush1.bf16.msra.mxu0 %v428
        %475 = vmatprep.subr.bf16.mxu0 %v455
        %476 = vmatpush1.bf16.msra.mxu0 %v452
        %477 = vmatprep.subr.bf16.mxu0 %v468
        %478 = vmatpush1.bf16.msra.mxu0 %v465
        %479 = vmatprep.subr.bf16.mxu0 0
        %480 = vmatpush1.bf16.msra.mxu0 0
        %481 = vmatprep.subr.bf16.mxu0 0
        %482 = vmatpush1.bf16.msra.mxu0 0
        %483 = vmatprep.subr.bf16.mxu0 0
        %484 = vmatpush1.bf16.msra.mxu0 0
        %485 = vmatprep.subr.bf16.mxu0 0
        %486 = vmatpush1.bf16.msra.mxu0 0
        %487 = vmatprep.subr.bf16.mxu0 0
        %488 = vmatpush1.bf16.msra.mxu0 0
        %489 = vmatprep.subr.bf16.mxu0 0
        %490 = vmatpush1.bf16.msra.mxu0 0
        %491 = vmatprep.subr.bf16.mxu0 0
        %492 = vmatpush1.bf16.msra.mxu0 0
        %493 = vmatprep.subr.bf16.mxu0 0
        %494 = vmatpush1.bf16.msra.mxu0 0
        %495 = vmatprep.subr.bf16.mxu0 0
        %496 = vmatpush1.bf16.msra.mxu0 0
        %497 = vmatprep.subr.bf16.mxu0 0
        %498 = vmatpush1.bf16.msra.mxu0 0
        %499 = vmatprep.subr.bf16.mxu0 0
        %500 = vmatpush1.bf16.msra.mxu0 0
        %501 = vmatprep.subr.bf16.mxu0 0
        %502 = vmatpush1.bf16.msra.mxu0 0
        %503 = vmatprep.subr.bf16.mxu0 0
        %504 = vmatpush1.bf16.msra.mxu0 0
        %505 = vmatprep.mubr.bf16.mxu0 0
        %506 = vmatmul.mubr.bf16.gmra.mrb[0].mxu0 %v462
        %v507 = vpop.f32.mrb[0].mxu0
        %v508 = vadd.f32 0.0, %v507
        %v509 = vpop.f32.mrb[0].mxu0
        %v510 = vadd.f32 0.0, %v509
        %v511 = vpop.f32.mrb[0].mxu0
        %v512 = vpop.f32.mrb[0].mxu0
        %513 = vdwg.mxu0
        %514 = vmatprep.subr.bf16.mxu0 0
        %515 = vmatpush1.bf16.msra.mxu0 %v434
        %516 = vmatprep.subr.bf16.mxu0 0
        %517 = vmatpush1.bf16.msra.mxu0 %v458
        %518 = vmatprep.subr.bf16.mxu0 0
        %519 = vmatpush1.bf16.msra.mxu0 %v471
        %520 = vmatprep.subr.bf16.mxu0 0
        %521 = vmatpush1.bf16.msra.mxu0 0
        %522 = vmatprep.subr.bf16.mxu0 0
        %523 = vmatpush1.bf16.msra.mxu0 0
        %524 = vmatprep.subr.bf16.mxu0 0
        %525 = vmatpush1.bf16.msra.mxu0 0
        %526 = vmatprep.subr.bf16.mxu0 0
        %527 = vmatpush1.bf16.msra.mxu0 0
        %528 = vmatprep.subr.bf16.mxu0 0
        %529 = vmatpush1.bf16.msra.mxu0 0
        %530 = vmatprep.subr.bf16.mxu0 0
        %531 = vmatpush1.bf16.msra.mxu0 0
        %532 = vmatprep.subr.bf16.mxu0 0
        %533 = vmatpush1.bf16.msra.mxu0 0
        %534 = vmatprep.subr.bf16.mxu0 0
        %535 = vmatpush1.bf16.msra.mxu0 0
        %536 = vmatprep.subr.bf16.mxu0 0
        %537 = vmatpush1.bf16.msra.mxu0 0
        %538 = vmatprep.subr.bf16.mxu0 0
        %539 = vmatpush1.bf16.msra.mxu0 0
        %540 = vmatprep.subr.bf16.mxu0 0
        %541 = vmatpush1.bf16.msra.mxu0 0
        %542 = vmatprep.subr.bf16.mxu0 0
        %543 = vmatpush1.bf16.msra.mxu0 0
        %544 = vmatprep.subr.bf16.mxu0 0
        %545 = vmatpush1.bf16.msra.mxu0 0
        %546 = vmatprep.mubr.bf16.mxu0 0
        %547 = vmatmul.mubr.bf16.gmra.mrb[0].mxu0 %v462
        %v548 = vpop.f32.mrb[0].mxu0
        %v549 = vadd.f32 0.0, %v548
        %v550 = vpop.f32.mrb[0].mxu0
        %v551 = vpop.f32.mrb[0].mxu0
        %v552 = vpop.f32.mrb[0].mxu0
        %553 = vdwg.mxu0
        %v554 = vld [vmem:[%s3] sm:$0xff]
        %v555 = vld [vmem:[%s4] sm:$0xff]
        %v557 = vlaneseq
        %v558 = vshrl.u32 %v557, 7
        %v559 = vsub.s32 0, %v558
        %v560 = vrot.slane %v305, %v559
        %v561 = vlaneseq
        %v562 = vshrl.u32 %v561, 7
        %v563 = vsub.s32 1, %v562
        %v564 = vrot.slane %v305, %v563
        %v565 = vlaneseq
        %v566 = vshrl.u32 %v565, 7
        %v567 = vsub.s32 2, %v566
        %v568 = vrot.slane %v305, %v567
        %v572 = vmul.f32 %v508, %v560
        %v573 = vmul.f32 %v510, %v564
        %v574 = vmul.f32 %v549, %v568
        %v575 = vsel %vm419, %v572, 0.0
        %v576 = vsel %vm419, %v573, 0.0
        %v577 = vadd.f32 %v575, %v576
        %vm578 = vcmask 257024
        %v579 = vsel %vm578, %v574, 0.0
        %v580 = vadd.f32 %v577, %v579
        %581 = vadd.xlane.f32.xlu0 %v580
        %v582 = vpop.xlane.xlu0 %581
        %v583 = vrot.slane %v582, 4
        %v584 = vadd.f32 %v582, %v583
        %v585 = vrot.slane %v584, 2
        %v586 = vadd.f32 %v584, %v585
        %v587 = vrot.slane %v586, 1
        %v588 = vadd.f32 %v586, %v587
        %s589 = vtos %v588
        %v590 = vmul.f32 %v572, %v572
        %v591 = vmul.f32 %v573, %v573
        %v592 = vmul.f32 %v574, %v574
        %v593 = vsel %vm419, %v590, 0.0
        %v594 = vsel %vm419, %v591, 0.0
        %v595 = vadd.f32 %v593, %v594
        %v596 = vsel %vm578, %v592, 0.0
        %v597 = vadd.f32 %v595, %v596
        %598 = vadd.xlane.f32.xlu0 %v597
        %v599 = vpop.xlane.xlu0 %598
        %v600 = vrot.slane %v599, 4
        %v601 = vadd.f32 %v599, %v600
        %v602 = vrot.slane %v601, 2
        %v603 = vadd.f32 %v601, %v602
        %v604 = vrot.slane %v603, 1
        %v605 = vadd.f32 %v603, %v604
        %s606 = vtos %v605
        %v607 = vrcp.pop 1024.0
        %s608 = vtos %v607
        %s609 = smul.f32 %s589, %s608
        %v610 = vrcp.pop 1024.0
        %s611 = vtos %v610
        %s612 = smul.f32 %s606, %s611
        %s613 = smul.f32 %s609, %s609
        %s614 = ssub.f32 %s612, %s613
        %s615 = sadd.f32 %s614, 1e-05
        %v616 = vstv %s615
        %v617 = vrsqrt.pop %v616
        %s618 = vtos %v617
        %v619 = vstv %s618
        %v620 = vmul.f32 %v554, %v619
        %v621 = vstv %s609
        %v622 = vmul.f32 %v621, %v620
        %v623 = vsub.f32 %v555, %v622
        %v627 = vrot.slane %v572, 4
        %v628 = vrot.slane %v573, 4
        %v629 = vrot.slane %v574, 4
        %v633 = vsel %vm419, %v627, 0.0
        %v634 = vsel %vm419, %v628, 0.0
        %v635 = vadd.f32 %v633, %v634
        %v636 = vsel %vm578, %v629, 0.0
        %v637 = vadd.f32 %v635, %v636
        %638 = vadd.xlane.f32.xlu0 %v637
        %v639 = vpop.xlane.xlu0 %638
        %v640 = vrot.slane %v639, 4
        %v641 = vadd.f32 %v639, %v640
        %v642 = vrot.slane %v641, 2
        %v643 = vadd.f32 %v641, %v642
        %v644 = vrot.slane %v643, 1
        %v645 = vadd.f32 %v643, %v644
        %s646 = vtos %v645
        %v650 = vrot.slane %v590, 4
        %v651 = vrot.slane %v591, 4
        %v652 = vrot.slane %v592, 4
        %v656 = vsel %vm419, %v650, 0.0
        %v657 = vsel %vm419, %v651, 0.0
        %v658 = vadd.f32 %v656, %v657
        %v659 = vsel %vm578, %v652, 0.0
        %v660 = vadd.f32 %v658, %v659
        %661 = vadd.xlane.f32.xlu0 %v660
        %v662 = vpop.xlane.xlu0 %661
        %v663 = vrot.slane %v662, 4
        %v664 = vadd.f32 %v662, %v663
        %v665 = vrot.slane %v664, 2
        %v666 = vadd.f32 %v664, %v665
        %v667 = vrot.slane %v666, 1
        %v668 = vadd.f32 %v666, %v667
        %s669 = vtos %v668
        %v670 = vrcp.pop 1024.0
        %s671 = vtos %v670
        %s672 = smul.f32 %s646, %s671
        %v673 = vrcp.pop 1024.0
        %s674 = vtos %v673
        %s675 = smul.f32 %s669, %s674
        %s676 = smul.f32 %s672, %s672
        %s677 = ssub.f32 %s675, %s676
        %s678 = sadd.f32 %s677, 1e-05
        %v679 = vstv %s678
        %v680 = vrsqrt.pop %v679
        %s681 = vtos %v680
        %v682 = vstv %s681
        %v683 = vmul.f32 %v554, %v682
        %v684 = vstv %s672
        %v685 = vmul.f32 %v684, %v683
        %v686 = vsub.f32 %v555, %v685
        %v687 = vsel %vm419, %v620, %v683
        %v688 = vsel %vm419, %v623, %v686
        %690 = vset.pattern.permute.xlu0 0
        %691 = vperm.xlu0 %690, %v687
        %v692 = vpop.permute.xlu0 %691
        %v694 = vmul.f32 %v508, %v692
        %v695 = vmul.f32 %v510, %v692
        %v696 = vmul.f32 %v549, %v692
        %698 = vset.pattern.permute.xlu0 0
        %699 = vperm.xlu0 %698, %v688
        %v700 = vpop.permute.xlu0 %699
        %v702 = vadd.f32 %v694, %v700
        %v703 = vadd.f32 %v695, %v700
        %v704 = vadd.f32 %v696, %v700
        %v705 = vmax.f32 %v702, 0.0
        %v706 = vmax.f32 %v703, 0.0
        %v707 = vmax.f32 %v704, 0.0
        %v708 = vmul.f32 %v705, %v560
        %v709 = vmul.f32 %v706, %v564
        %v710 = vmul.f32 %v707, %v568
        %v711 = vpack.c.bf16 %v708, %v708
        %v712 = vpack.c.bf16 %v709, %v709
        %v713 = vpack.c.bf16 %v710, %v710
        %717 = vrot.lane.b32.xlu0 %v711, 19
        %v718 = vpop.permute.xlu0 %717
        %719 = vrot.lane.b32.xlu0 %v712, 19
        %v720 = vpop.permute.xlu0 %719
        %721 = vrot.lane.b32.xlu0 %v713, 19
        %v722 = vpop.permute.xlu0 %721
        %vm723 = vcmask 154624
        %v724 = vsel %vm723, %v718, %v720
        %v725 = vsel %vm723, %v720, %v722
        %vm726 = vcmask 154624
        %v729 = vsel %vm726, 0, %v718
        %vm730 = vcmask 416768
        %v732 = vsel %vm730, %v725, 0
        %v733 = vld [vmem:[%s5] sm:$0xf]
        %v736 = vrot.slane %v729, 4
        %v737 = vrot.slane %v724, 4
        %v738 = vrot.slane %v732, 4
        %739 = vrot.lane.b32.xlu0 %v736, 127
        %v740 = vpop.permute.xlu0 %739
        %741 = vrot.lane.b32.xlu0 %v737, 127
        %v742 = vpop.permute.xlu0 %741
        %743 = vrot.lane.b32.xlu0 %v738, 127
        %v744 = vpop.permute.xlu0 %743
        %v745 = vsel %vm340, %v740, %v742
        %v746 = vsel %vm340, %v742, %v744
        %747 = vrot.lane.b32.xlu0 %v729, 126
        %v748 = vpop.permute.xlu0 %747
        %749 = vrot.lane.b32.xlu0 %v724, 126
        %v750 = vpop.permute.xlu0 %749
        %751 = vrot.lane.b32.xlu0 %v732, 126
        %v752 = vpop.permute.xlu0 %751
        %v753 = vsel %vm351, %v748, %v750
        %v754 = vsel %vm351, %v750, %v752
        %755 = vrot.lane.b32.xlu0 %v736, 110
        %v756 = vpop.permute.xlu0 %755
        %757 = vrot.lane.b32.xlu0 %v737, 110
        %v758 = vpop.permute.xlu0 %757
        %759 = vrot.lane.b32.xlu0 %v738, 110
        %v760 = vpop.permute.xlu0 %759
        %v761 = vsel %vm361, %v756, %v758
        %v762 = vsel %vm361, %v758, %v760
        %763 = vrot.lane.b32.xlu0 %v729, 109
        %v764 = vpop.permute.xlu0 %763
        %765 = vrot.lane.b32.xlu0 %v724, 109
        %v766 = vpop.permute.xlu0 %765
        %767 = vrot.lane.b32.xlu0 %v732, 109
        %v768 = vpop.permute.xlu0 %767
        %v769 = vsel %vm370, %v764, %v766
        %v770 = vsel %vm370, %v766, %v768
        %771 = vrot.lane.b32.xlu0 %v736, 108
        %v772 = vpop.permute.xlu0 %771
        %773 = vrot.lane.b32.xlu0 %v737, 108
        %v774 = vpop.permute.xlu0 %773
        %775 = vrot.lane.b32.xlu0 %v738, 108
        %v776 = vpop.permute.xlu0 %775
        %v777 = vsel %vm379, %v772, %v774
        %v778 = vsel %vm379, %v774, %v776
        %779 = vrot.lane.b32.xlu0 %v729, 92
        %v780 = vpop.permute.xlu0 %779
        %781 = vrot.lane.b32.xlu0 %v724, 92
        %v782 = vpop.permute.xlu0 %781
        %783 = vrot.lane.b32.xlu0 %v732, 92
        %v784 = vpop.permute.xlu0 %783
        %v785 = vsel %vm388, %v780, %v782
        %v786 = vsel %vm388, %v782, %v784
        %787 = vrot.lane.b32.xlu0 %v736, 91
        %v788 = vpop.permute.xlu0 %787
        %789 = vrot.lane.b32.xlu0 %v737, 91
        %v790 = vpop.permute.xlu0 %789
        %791 = vrot.lane.b32.xlu0 %v738, 91
        %v792 = vpop.permute.xlu0 %791
        %v793 = vsel %vm397, %v788, %v790
        %v794 = vsel %vm397, %v790, %v792
        %795 = vrot.lane.b32.xlu0 %v729, 90
        %v796 = vpop.permute.xlu0 %795
        %797 = vrot.lane.b32.xlu0 %v724, 90
        %v798 = vpop.permute.xlu0 %797
        %799 = vrot.lane.b32.xlu0 %v732, 90
        %v800 = vpop.permute.xlu0 %799
        %v801 = vsel %vm406, %v796, %v798
        %v802 = vsel %vm406, %v798, %v800
        %v804 = vsel %vm419, %v729, %v745
        %v808 = vsel %vm419, %v724, %v746
        %v811 = vsel %vm419, %v732, %v744
        %v815 = vsel %vm419, %v753, %v761
        %v819 = vsel %vm419, %v754, %v762
        %v823 = vsel %vm419, %v752, %v760
        %v827 = vsel %vm419, %v769, %v777
        %v831 = vsel %vm419, %v770, %v778
        %v835 = vsel %vm419, %v768, %v776
        %v839 = vsel %vm419, %v785, %v793
        %v843 = vsel %vm419, %v786, %v794
        %v847 = vsel %vm419, %v784, %v792
        %vm849 = vcmask 588800
        %v851 = vsel %vm849, %v733, 0
        %v854 = vsel %vm419, %v801, 0
        %v857 = vsel %vm419, %v802, 0
        %v860 = vsel %vm419, %v800, 0
        %862 = vmatprep.subr.bf16.mxu0 %v808
        %863 = vmatpush1.bf16.msra.mxu0 %v804
        %864 = vmatprep.subr.bf16.mxu0 %v819
        %865 = vmatpush1.bf16.msra.mxu0 %v815
        %866 = vmatprep.subr.bf16.mxu0 %v831
        %867 = vmatpush1.bf16.msra.mxu0 %v827
        %868 = vmatprep.subr.bf16.mxu0 %v843
        %869 = vmatpush1.bf16.msra.mxu0 %v839
        %870 = vmatprep.subr.bf16.mxu0 %v857
        %871 = vmatpush1.bf16.msra.mxu0 %v854
        %872 = vmatprep.subr.bf16.mxu0 0
        %873 = vmatpush1.bf16.msra.mxu0 0
        %874 = vmatprep.subr.bf16.mxu0 0
        %875 = vmatpush1.bf16.msra.mxu0 0
        %876 = vmatprep.subr.bf16.mxu0 0
        %877 = vmatpush1.bf16.msra.mxu0 0
        %878 = vmatprep.subr.bf16.mxu0 0
        %879 = vmatpush1.bf16.msra.mxu0 0
        %880 = vmatprep.subr.bf16.mxu0 0
        %881 = vmatpush1.bf16.msra.mxu0 0
        %882 = vmatprep.subr.bf16.mxu0 0
        %883 = vmatpush1.bf16.msra.mxu0 0
        %884 = vmatprep.subr.bf16.mxu0 0
        %885 = vmatpush1.bf16.msra.mxu0 0
        %886 = vmatprep.subr.bf16.mxu0 0
        %887 = vmatpush1.bf16.msra.mxu0 0
        %888 = vmatprep.subr.bf16.mxu0 0
        %889 = vmatpush1.bf16.msra.mxu0 0
        %890 = vmatprep.subr.bf16.mxu0 0
        %891 = vmatpush1.bf16.msra.mxu0 0
        %892 = vmatprep.subr.bf16.mxu0 0
        %893 = vmatpush1.bf16.msra.mxu0 0
        %894 = vmatprep.mubr.bf16.mxu0 0
        %895 = vmatmul.mubr.bf16.gmra.mrb[0].mxu0 %v851
        %v896 = vpop.f32.mrb[0].mxu0
        %v897 = vadd.f32 0.0, %v896
        %v898 = vpop.f32.mrb[0].mxu0
        %v899 = vadd.f32 0.0, %v898
        %v900 = vpop.f32.mrb[0].mxu0
        %v901 = vpop.f32.mrb[0].mxu0
        %902 = vdwg.mxu0
        %903 = vmatprep.subr.bf16.mxu0 0
        %904 = vmatpush1.bf16.msra.mxu0 %v811
        %905 = vmatprep.subr.bf16.mxu0 0
        %906 = vmatpush1.bf16.msra.mxu0 %v823
        %907 = vmatprep.subr.bf16.mxu0 0
        %908 = vmatpush1.bf16.msra.mxu0 %v835
        %909 = vmatprep.subr.bf16.mxu0 0
        %910 = vmatpush1.bf16.msra.mxu0 %v847
        %911 = vmatprep.subr.bf16.mxu0 0
        %912 = vmatpush1.bf16.msra.mxu0 %v860
        %913 = vmatprep.subr.bf16.mxu0 0
        %914 = vmatpush1.bf16.msra.mxu0 0
        %915 = vmatprep.subr.bf16.mxu0 0
        %916 = vmatpush1.bf16.msra.mxu0 0
        %917 = vmatprep.subr.bf16.mxu0 0
        %918 = vmatpush1.bf16.msra.mxu0 0
        %919 = vmatprep.subr.bf16.mxu0 0
        %920 = vmatpush1.bf16.msra.mxu0 0
        %921 = vmatprep.subr.bf16.mxu0 0
        %922 = vmatpush1.bf16.msra.mxu0 0
        %923 = vmatprep.subr.bf16.mxu0 0
        %924 = vmatpush1.bf16.msra.mxu0 0
        %925 = vmatprep.subr.bf16.mxu0 0
        %926 = vmatpush1.bf16.msra.mxu0 0
        %927 = vmatprep.subr.bf16.mxu0 0
        %928 = vmatpush1.bf16.msra.mxu0 0
        %929 = vmatprep.subr.bf16.mxu0 0
        %930 = vmatpush1.bf16.msra.mxu0 0
        %931 = vmatprep.subr.bf16.mxu0 0
        %932 = vmatpush1.bf16.msra.mxu0 0
        %933 = vmatprep.subr.bf16.mxu0 0
        %934 = vmatpush1.bf16.msra.mxu0 0
        %935 = vmatprep.mubr.bf16.mxu0 0
        %936 = vmatmul.mubr.bf16.gmra.mrb[0].mxu0 %v851
        %v937 = vpop.f32.mrb[0].mxu0
        %v938 = vadd.f32 0.0, %v937
        %v939 = vpop.f32.mrb[0].mxu0
        %v940 = vpop.f32.mrb[0].mxu0
        %v941 = vpop.f32.mrb[0].mxu0
        %942 = vdwg.mxu0
        %v943 = vld [vmem:[%s6] sm:$0xff]
        %v944 = vld [vmem:[%s7] sm:$0xff]
        %v945 = vmul.f32 %v897, %v560
        %v946 = vmul.f32 %v899, %v564
        %v947 = vmul.f32 %v938, %v568
        %v948 = vsel %vm419, %v945, 0.0
        %v949 = vsel %vm419, %v946, 0.0
        %v950 = vadd.f32 %v948, %v949
        %v951 = vsel %vm578, %v947, 0.0
        %v952 = vadd.f32 %v950, %v951
        %953 = vadd.xlane.f32.xlu0 %v952
        %v954 = vpop.xlane.xlu0 %953
        %v955 = vrot.slane %v954, 4
        %v956 = vadd.f32 %v954, %v955
        %v957 = vrot.slane %v956, 2
        %v958 = vadd.f32 %v956, %v957
        %v959 = vrot.slane %v958, 1
        %v960 = vadd.f32 %v958, %v959
        %s961 = vtos %v960
        %v962 = vmul.f32 %v945, %v945
        %v963 = vmul.f32 %v946, %v946
        %v964 = vmul.f32 %v947, %v947
        %v965 = vsel %vm419, %v962, 0.0
        %v966 = vsel %vm419, %v963, 0.0
        %v967 = vadd.f32 %v965, %v966
        %v968 = vsel %vm578, %v964, 0.0
        %v969 = vadd.f32 %v967, %v968
        %970 = vadd.xlane.f32.xlu0 %v969
        %v971 = vpop.xlane.xlu0 %970
        %v972 = vrot.slane %v971, 4
        %v973 = vadd.f32 %v971, %v972
        %v974 = vrot.slane %v973, 2
        %v975 = vadd.f32 %v973, %v974
        %v976 = vrot.slane %v975, 1
        %v977 = vadd.f32 %v975, %v976
        %s978 = vtos %v977
        %v979 = vrcp.pop 1024.0
        %s980 = vtos %v979
        %s981 = smul.f32 %s961, %s980
        %v982 = vrcp.pop 1024.0
        %s983 = vtos %v982
        %s984 = smul.f32 %s978, %s983
        %s985 = smul.f32 %s981, %s981
        %s986 = ssub.f32 %s984, %s985
        %s987 = sadd.f32 %s986, 1e-05
        %v988 = vstv %s987
        %v989 = vrsqrt.pop %v988
        %s990 = vtos %v989
        %v991 = vstv %s990
        %v992 = vmul.f32 %v943, %v991
        %v993 = vstv %s981
        %v994 = vmul.f32 %v993, %v992
        %v995 = vsub.f32 %v944, %v994
        %v999 = vrot.slane %v945, 4
        %v1000 = vrot.slane %v946, 4
        %v1001 = vrot.slane %v947, 4
        %v1005 = vsel %vm419, %v999, 0.0
        %v1006 = vsel %vm419, %v1000, 0.0
        %v1007 = vadd.f32 %v1005, %v1006
        %v1008 = vsel %vm578, %v1001, 0.0
        %v1009 = vadd.f32 %v1007, %v1008
        %1010 = vadd.xlane.f32.xlu0 %v1009
        %v1011 = vpop.xlane.xlu0 %1010
        %v1012 = vrot.slane %v1011, 4
        %v1013 = vadd.f32 %v1011, %v1012
        %v1014 = vrot.slane %v1013, 2
        %v1015 = vadd.f32 %v1013, %v1014
        %v1016 = vrot.slane %v1015, 1
        %v1017 = vadd.f32 %v1015, %v1016
        %s1018 = vtos %v1017
        %v1022 = vrot.slane %v962, 4
        %v1023 = vrot.slane %v963, 4
        %v1024 = vrot.slane %v964, 4
        %v1028 = vsel %vm419, %v1022, 0.0
        %v1029 = vsel %vm419, %v1023, 0.0
        %v1030 = vadd.f32 %v1028, %v1029
        %v1031 = vsel %vm578, %v1024, 0.0
        %v1032 = vadd.f32 %v1030, %v1031
        %1033 = vadd.xlane.f32.xlu0 %v1032
        %v1034 = vpop.xlane.xlu0 %1033
        %v1035 = vrot.slane %v1034, 4
        %v1036 = vadd.f32 %v1034, %v1035
        %v1037 = vrot.slane %v1036, 2
        %v1038 = vadd.f32 %v1036, %v1037
        %v1039 = vrot.slane %v1038, 1
        %v1040 = vadd.f32 %v1038, %v1039
        %s1041 = vtos %v1040
        %v1042 = vrcp.pop 1024.0
        %s1043 = vtos %v1042
        %s1044 = smul.f32 %s1018, %s1043
        %v1045 = vrcp.pop 1024.0
        %s1046 = vtos %v1045
        %s1047 = smul.f32 %s1041, %s1046
        %s1048 = smul.f32 %s1044, %s1044
        %s1049 = ssub.f32 %s1047, %s1048
        %s1050 = sadd.f32 %s1049, 1e-05
        %v1051 = vstv %s1050
        %v1052 = vrsqrt.pop %v1051
        %s1053 = vtos %v1052
        %v1054 = vstv %s1053
        %v1055 = vmul.f32 %v943, %v1054
        %v1056 = vstv %s1044
        %v1057 = vmul.f32 %v1056, %v1055
        %v1058 = vsub.f32 %v944, %v1057
        %v1059 = vsel %vm419, %v992, %v1055
        %v1060 = vsel %vm419, %v995, %v1058
        %1062 = vset.pattern.permute.xlu0 0
        %1063 = vperm.xlu0 %1062, %v1059
        %v1064 = vpop.permute.xlu0 %1063
        %v1066 = vmul.f32 %v897, %v1064
        %v1067 = vmul.f32 %v899, %v1064
        %v1068 = vmul.f32 %v938, %v1064
        %1070 = vset.pattern.permute.xlu0 0
        %1071 = vperm.xlu0 %1070, %v1060
        %v1072 = vpop.permute.xlu0 %1071
        %v1074 = vadd.f32 %v1066, %v1072
        %v1075 = vadd.f32 %v1067, %v1072
        %v1076 = vadd.f32 %v1068, %v1072
        %v1077 = vmax.f32 %v1074, 0.0
        %v1078 = vmax.f32 %v1075, 0.0
        %v1079 = vmax.f32 %v1076, 0.0
        %1080 = vst [vmem:[%s298] sm:$0xff] %v1077
        %1081 = vst [vmem:[%s298 + $0x8] sm:$0xff] %v1078
        %vm1082 = vcmask 261120
        %1083 = vst.msk [vmem:[%s298 + $0x10] sm:$0xff] %vm1082, %v1079
        %s1084 = sand.u32 %s203, 1
        %s1085 = scalar_lea.sflag [#allocation3], %s1084
        %s1086 = sand.u32 %s203, 1
        %s1087 = smul.addr %s1086, 24
        %s1088 = scalar_lea.vmem [#allocation2], %s1087
        // Predicated region
        $region53: #{tpu_custom_call.1} parent=51 // pred_check
          %p1089 = pneg %p213
        $region54: #{tpu_custom_call.1} parent=51 // pred_check_branch
          %1091 = sbr.rel (%p1089) target = $region56
        $region55: #{tpu_custom_call.1} parent=51 // pred_region
          %s1093 = ssub.s32 384, 384
          %1094 = vsyncadd %s1085, %s1093
          %s1095 = smul.addr %s22, 3
          %s1096 = smul.addr %s1095, 128
          %s1097 = scalar_lea.hbm %s8, %s1096
          %s1099 = sshll.u32 %s1088, 4
          %s1100 = int_to_ptr.vmem [resolvable:$true] %s1099
          %1102 = dma.vmem_to_hbm [thread:$0]  %s1100, 384, %s1097, %s1085
        $region56: #{tpu_custom_call.1} parent=51 // pred_fallthru
          _
      $region52: #{tpu_custom_call.1} parent=5 // pred_fallthru
        _
      %p1103 = scmp.le.s32.totalorder 2, %s17
      // Predicated region
      $region57: #{tpu_custom_call.1} parent=5 // pred_check
        %p1104 = pneg %p1103
      $region58: #{tpu_custom_call.1} parent=5 // pred_check_branch
        %1106 = sbr.rel (%p1104) target = $region60
      $region59: #{tpu_custom_call.1} parent=5 // pred_region
        %s1107 = ssub.s32 %s17, 2
        // Predicated region
        $region61: #{tpu_custom_call.1} parent=59 // pred_check
          %p1108 = pneg %p219
        $region62: #{tpu_custom_call.1} parent=59 // pred_check_branch
          %1110 = sbr.rel (%p1108) target = $region64
        $region63: #{tpu_custom_call.1} parent=59 // pred_region
          %s1111 = sand.u32 %s204, 1
          %s1112 = scalar_lea.sflag [#allocation3], %s1111
          %s1113 = sand.u32 %s204, 1
          %s1114 = smul.addr %s1113, 24
          %s1115 = scalar_lea.vmem [#allocation2], %s1114
          %1116 = dma.done %s1112, 384
        $region64: #{tpu_custom_call.1} parent=59 // pred_fallthru
          _
      $region60: #{tpu_custom_call.1} parent=5 // pred_fallthru
        _
    $region6: #{tpu_custom_call.1} parent=1 // loop_footer
      %s21 = sadd.s32 1, %s17
    $region7: #{tpu_custom_call.1} parent=1 // loop_footer_branch
      %16 = sbr.rel target = $region3
    $region8: #{tpu_custom_call.1} parent=1 // loop_exit
      _
    %1117 = vsyncpa [#allocation3], 1
    %s1118 = scalar_lea.sflag [#allocation3], 1
    %1119 = vsyncpa %s1118, 1

</llo_original>
